<compile_context>
chip_gen: v7x
topology: tpu7x:2x2x1
jax: 0.10.0
libtpu: 0.0.40
codegen_flags: <defaults>
</compile_context>

<pallas_src>
import functools

import jax
import jax.numpy as jnp
from jax import lax
from jax.experimental import pallas as pl
from jax.experimental.pallas import tpu as pltpu

N_STATES = 64
HIDDEN = 64
CHUNK = 256  # rows of the batch tile processed per inner-loop step


def _round_up(x: int, m: int) -> int:
    return (x + m - 1) // m * m


def _critic_kernel(x_ref, w12_ref, b12_ref, w3_ref, b3_ref, out_ref,
                   *, chunk: int, num_chunks: int, unroll):
    """One batch tile: Linear -> ReLU -> Linear -> ReLU -> Linear(64->1),
    processed in `chunk`-row sub-blocks so intermediates stay in vregs."""
    n_in = x_ref.shape[1]
    # Parameters are VMEM-resident (constant index maps); load once per tile.
    w1 = w12_ref[:n_in, :]          # (n_states, H) bf16
    w2 = w12_ref[n_in:, :]          # (H, H)        bf16
    b1 = b12_ref[0:1, :]            # (1, H) f32
    b2 = b12_ref[1:2, :]            # (1, H) f32
    w3p = w3_ref[...]               # (8, H) f32 ; row 0 holds the value-head weights
    b3 = b3_ref[0, 0]               # f32 scalar (SMEM)

    def compute(c):
        r = c * chunk
        if not isinstance(r, int):
            r = pl.multiple_of(r, chunk)
        x = x_ref[pl.ds(r, chunk), :]                          # (chunk, n_in) bf16
        # Layer 1: MXU matmul (bf16 operands, f32 accumulation) + bias + ReLU.
        h1 = jnp.dot(x, w1, preferred_element_type=jnp.float32) + b1
        h1 = jnp.maximum(h1, 0.0)
        # Layer 2.
        h2 = jnp.dot(h1.astype(jnp.bfloat16), w2,
                     preferred_element_type=jnp.float32) + b2
        h2 = jnp.maximum(h2, 0.0)                              # (chunk, H) f32
        # Value head 64 -> 1, emitted lane-dense: contract H against H
        # (NT dimension numbers, same as flash-attention's q.k^T) -> (8, chunk);
        # row 0 is the value row for this chunk.
        v = lax.dot_general(w3p, h2, (((1,), (1,)), ((), ())),
                            preferred_element_type=jnp.float32)
        vrow = v[0:1, :] + b3                                  # (1, chunk) f32
        # One lane-dense row store per chunk (vs chunk/8 one-lane masked stores).
        out_ref[pl.ds(c, 1), :] = vrow.astype(out_ref.dtype)

    if num_chunks == 1:
        compute(0)
    else:
        def body(c, carry):
            compute(c)
            return carry
        lax.fori_loop(0, num_chunks, body, 0, unroll=unroll)


def critic_forward(x, params, *, block_batch=8192):
    """Pallas forward pass; numerically equivalent (up to bf16 input/weight casts)
    to the PyTorch Critic (x stored (batch, n_states); weights (in, out): x@W+b)."""
    w1, b1, w2, b2, w3, b3 = params
    batch, n_states = x.shape

    # ---- batch tiling ------------------------------------------------------
    chunk = CHUNK
    padded_min = _round_up(batch, chunk)          # chunk granularity (mult. of 16)
    if padded_min <= 2 * chunk:
        tb = padded_min                           # small batch: one tile
    else:
        # At least two grid steps so the v7x megacore can split the batch across
        # both TensorCores; capped by block_batch; tiles stay chunk-aligned.
        tb = min(_round_up(block_batch, chunk),
                 _round_up((padded_min + 1) // 2, chunk))
    padded = _round_up(padded_min, tb)
    num_tiles = padded // tb
    num_chunks = tb // chunk

    if num_chunks <= 8:
        unroll = True
    elif num_chunks % 8 == 0:
        unroll = 8
    elif num_chunks % 4 == 0:
        unroll = 4
    elif num_chunks % 2 == 0:
        unroll = 2
    else:
        unroll = 1

    if padded != batch:
        # Tail rows produce ReLU(bias)-derived garbage; sliced off below.
        x = jnp.pad(x, ((0, padded - batch), (0, 0)))

    # ---- parameter / input packing -----------------------------------------
    x_bf16 = x.astype(jnp.bfloat16)
    w12 = jnp.concatenate([w1, w2], axis=0).astype(jnp.bfloat16)    # (n+H, H) bf16
    b12 = jnp.concatenate([b1, b2], axis=0)                         # (2, H)   f32
    w3_pad = jnp.zeros((8, HIDDEN), jnp.float32).at[0, :].set(w3[:, 0])
    b3_s = b3.reshape(1, 1)                                         # (1, 1)   f32

    param_bytes = w12.size * 2 + b12.size * 4 + w3_pad.size * 4 + 4
    cost = pl.CostEstimate(
        flops=2 * padded * (n_states * HIDDEN + HIDDEN * HIDDEN + 8 * HIDDEN),
        bytes_accessed=padded * n_states * 2 + padded * 4 + param_bytes,
        transcendentals=0,
    )

    kernel = functools.partial(_critic_kernel, chunk=chunk,
                               num_chunks=num_chunks, unroll=unroll)

    out = pl.pallas_call(
        kernel,
        out_shape=jax.ShapeDtypeStruct((num_tiles, num_chunks, chunk), jnp.float32),
        grid=(num_tiles,),
        in_specs=[
            pl.BlockSpec((tb, n_states), lambda i: (i, 0)),     # x: streamed per tile
            pl.BlockSpec(w12.shape, lambda i: (0, 0)),          # weights: VMEM-resident
            pl.BlockSpec(b12.shape, lambda i: (0, 0)),
            pl.BlockSpec(w3_pad.shape, lambda i: (0, 0)),
            pl.BlockSpec(memory_space=pltpu.MemorySpace.SMEM),  # b3 scalar in SMEM
        ],
        out_specs=pl.BlockSpec((None, num_chunks, chunk), lambda i: (i, 0, 0)),
        compiler_params=pltpu.CompilerParams(
            dimension_semantics=("parallel",),        # v7x megacore batch sharding
            vmem_limit_bytes=32 * 1024 * 1024,        # explicit (covers v5e default)
        ),
        cost_estimate=cost,
    )(x_bf16, w12, b12, w3_pad, b3_s)

    # (num_tiles, num_chunks, chunk) flattened row-major == batch order.
    return out.reshape(padded, 1)[:batch]


def init_params(key):
    """Deterministic PyTorch-style (uniform fan-in) init; weights stored (in, out)."""
    ks = jax.random.split(key, 6)

    def lin(kw, kb, fan_in, fan_out):
        bound = 1.0 / jnp.sqrt(fan_in)
        w = jax.random.uniform(kw, (fan_in, fan_out), jnp.float32, -bound, bound)
        b = jax.random.uniform(kb, (1, fan_out), jnp.float32, -bound, bound)
        return w, b

    w1, b1 = lin(ks[0], ks[1], N_STATES, HIDDEN)
    w2, b2 = lin(ks[2], ks[3], HIDDEN, HIDDEN)
    w3, b3 = lin(ks[4], ks[5], HIDDEN, 1)
    return (w1, b1, w2, b2, w3, b3)


def critic_reference(x, params):
    """Pure-f32 reference."""
    w1, b1, w2, b2, w3, b3 = params
    h1 = jnp.maximum(x @ w1 + b1, 0.0)
    h2 = jnp.maximum(h1 @ w2 + b2, 0.0)
    return h2 @ w3 + b3


def critic_reference_bf16(x, params):
    """Reference applying the same bf16 casts as the kernel (f32 accumulation)."""
    w1, b1, w2, b2, w3, b3 = params
    rt = lambda a: a.astype(jnp.bfloat16).astype(jnp.float32)
    h1 = jnp.maximum(rt(x) @ rt(w1) + b1, 0.0)
    h2 = jnp.maximum(rt(h1) @ rt(w2) + b2, 0.0)
    return jnp.sum(h2 * w3.T, axis=-1, keepdims=True) + b3


if __name__ == "__main__":
    key = jax.random.PRNGKey(0)
    k_x1, k_x2, k_p = jax.random.split(key, 3)
    params = init_params(k_p)

    # Small, non-aligned batch -> single-tile, single-chunk path + padding.
    batch1 = 200
    x1 = jax.random.normal(k_x1, (batch1, N_STATES), dtype=jnp.float32)
    v1 = jax.block_until_ready(critic_forward(x1, params))

    # Larger batch with a small block_batch -> multi-tile grid, multi-chunk
    # fori_loop body, padded tail tile (still small shapes).
    batch2 = 1500
    x2 = jax.random.normal(k_x2, (batch2, N_STATES), dtype=jnp.float32)
    v2 = jax.block_until_ready(critic_forward(x2, params, block_batch=512))

    ref1_bf16 = critic_reference_bf16(x1, params)
    ref2_bf16 = critic_reference_bf16(x2, params)
    ref1_f32 = critic_reference(x1, params)

    assert v1.shape == (batch1, 1)
    assert v2.shape == (batch2, 1)
    # Tight check vs. a reference that mirrors the kernel's bf16 input casts.
    assert jnp.allclose(v1, ref1_bf16, atol=2e-3, rtol=2e-3)
    assert jnp.allclose(v2, ref2_bf16, atol=2e-3, rtol=2e-3)
    # Loose sanity check vs. the pure-f32 reference.
    assert jnp.allclose(v1, ref1_f32, atol=1e-1, rtol=1e-1)

    print("KERNEL_OK")
</pallas_src>

<mosaic_0001>
module attributes {stable_mosaic.version = 11 : i64} {
  func.func @_critic_kernel(%arg0: i32, %arg1: memref<256x64xbf16, #tpu.memory_space<vmem>>, %arg2: memref<128x64xbf16, #tpu.memory_space<vmem>>, %arg3: memref<2x64xf32, #tpu.memory_space<vmem>>, %arg4: memref<8x64xf32, #tpu.memory_space<vmem>>, %arg5: memref<1x1xf32, #tpu.memory_space<smem>>, %arg6: memref<1x1x256xf32, #tpu.memory_space<vmem>>) attributes {dimension_semantics = [#tpu.dimension_semantics<parallel>], iteration_bounds = array<i64: 1>, scalar_prefetch = 0 : i64, scratch_operands = 0 : i64, tpu.core_type = #tpu.core_type<tc>, window_params = [{transform_indices = @transform_0, window_bounds = array<i64: 256, 64>}, {pipeline_mode = #tpu.pipeline_mode<synchronous>, transform_indices = @transform_1, window_bounds = array<i64: 128, 64>}, {pipeline_mode = #tpu.pipeline_mode<synchronous>, transform_indices = @transform_2, window_bounds = array<i64: 2, 64>}, {pipeline_mode = #tpu.pipeline_mode<synchronous>, transform_indices = @transform_3, window_bounds = array<i64: 8, 64>}, {transform_indices = @transform_4, window_bounds = array<i64: 1, 1>}, {transform_indices = @transform_5, window_bounds = array<i64: 1, 1, 256>}]} {
    %c0 = arith.constant 0 : index
    %c0_0 = arith.constant 0 : index
    %0 = vector.load %arg2[%c0, %c0_0] : memref<128x64xbf16, #tpu.memory_space<vmem>>, vector<64x64xbf16>
    %c64 = arith.constant 64 : index
    %c0_1 = arith.constant 0 : index
    %1 = vector.load %arg2[%c64, %c0_1] : memref<128x64xbf16, #tpu.memory_space<vmem>>, vector<64x64xbf16>
    %c0_2 = arith.constant 0 : index
    %c0_3 = arith.constant 0 : index
    %2 = vector.load %arg3[%c0_2, %c0_3] : memref<2x64xf32, #tpu.memory_space<vmem>>, vector<1x64xf32>
    %c1 = arith.constant 1 : index
    %c0_4 = arith.constant 0 : index
    %3 = vector.load %arg3[%c1, %c0_4] : memref<2x64xf32, #tpu.memory_space<vmem>>, vector<1x64xf32>
    %c0_5 = arith.constant 0 : index
    %c0_6 = arith.constant 0 : index
    %4 = vector.load %arg4[%c0_5, %c0_6] : memref<8x64xf32, #tpu.memory_space<vmem>>, vector<8x64xf32>
    %c0_7 = arith.constant 0 : index
    %c0_8 = arith.constant 0 : index
    %5 = memref.load %arg5[%c0_7, %c0_8] : memref<1x1xf32, #tpu.memory_space<smem>>
    %c0_9 = arith.constant 0 : index
    %c0_10 = arith.constant 0 : index
    %6 = vector.load %arg1[%c0_9, %c0_10] : memref<256x64xbf16, #tpu.memory_space<vmem>>, vector<256x64xbf16>
    %cst = arith.constant dense<0.000000e+00> : vector<256x64xf32>
    %7 = tpu.matmul %6, %0, %cst {dimension_numbers = #tpu.dot_dimension_numbers<[1], [0], [0], [1], [0, 0, 1, 1], [], []>} : vector<256x64xbf16>, vector<64x64xbf16>, vector<256x64xf32> -> vector<256x64xf32>
    %8 = vector.broadcast %2 : vector<1x64xf32> to vector<256x64xf32>
    %9 = arith.addf %7, %8 : vector<256x64xf32>
    %cst_11 = arith.constant 0.000000e+00 : f32
    %10 = vector.broadcast %cst_11 : f32 to vector<256x64xf32>
    %11 = arith.maximumf %9, %10 : vector<256x64xf32>
    %12 = arith.truncf %11 : vector<256x64xf32> to vector<256x64xbf16>
    %cst_12 = arith.constant dense<0.000000e+00> : vector<256x64xf32>
    %13 = tpu.matmul %12, %1, %cst_12 {dimension_numbers = #tpu.dot_dimension_numbers<[1], [0], [0], [1], [0, 0, 1, 1], [], []>} : vector<256x64xbf16>, vector<64x64xbf16>, vector<256x64xf32> -> vector<256x64xf32>
    %14 = vector.broadcast %3 : vector<1x64xf32> to vector<256x64xf32>
    %15 = arith.addf %13, %14 : vector<256x64xf32>
    %cst_13 = arith.constant 0.000000e+00 : f32
    %16 = vector.broadcast %cst_13 : f32 to vector<256x64xf32>
    %17 = arith.maximumf %15, %16 : vector<256x64xf32>
    %cst_14 = arith.constant dense<0.000000e+00> : vector<8x256xf32>
    %18 = tpu.matmul %4, %17, %cst_14 {dimension_numbers = #tpu.dot_dimension_numbers<[1], [1], [0], [0], [0, 0, 1, 0], [], []>} : vector<8x64xf32>, vector<256x64xf32>, vector<8x256xf32> -> vector<8x256xf32>
    %19 = vector.extract_strided_slice %18 {offsets = [0, 0], sizes = [1, 256], strides = [1, 1]} : vector<8x256xf32> to vector<1x256xf32>
    %20 = vector.broadcast %5 : f32 to vector<1x256xf32>
    %21 = arith.addf %19, %20 : vector<1x256xf32>
    %c0_15 = arith.constant 0 : index
    %c0_16 = arith.constant 0 : index
    %c0_17 = arith.constant 0 : index
    %22 = vector.load %arg6[%c0_15, %c0_16, %c0_17] : memref<1x1x256xf32, #tpu.memory_space<vmem>>, vector<1x1x256xf32>
    %23 = vector.shape_cast %22 : vector<1x1x256xf32> to vector<1x256xf32>
    %24 = vector.shape_cast %21 : vector<1x256xf32> to vector<1x1x256xf32>
    tpu.vector_store %arg6[%c0_15, %c0_16, %c0_17], %24 {strides = array<i32>} : memref<1x1x256xf32, #tpu.memory_space<vmem>>, vector<1x1x256xf32>,
    return
  }
  func.func @transform_0(%arg0: i32) -> (i32, i32) {
    %c0_i32 = arith.constant 0 : i32
    %c0_i32_0 = arith.constant 0 : i32
    return %arg0, %c0_i32 : i32, i32
  }
  func.func @transform_1(%arg0: i32) -> (i32, i32) {
    %c0_i32 = arith.constant 0 : i32
    %c0_i32_0 = arith.constant 0 : i32
    %c0_i32_1 = arith.constant 0 : i32
    return %c0_i32, %c0_i32_0 : i32, i32
  }
  func.func @transform_2(%arg0: i32) -> (i32, i32) {
    %c0_i32 = arith.constant 0 : i32
    %c0_i32_0 = arith.constant 0 : i32
    %c0_i32_1 = arith.constant 0 : i32
    return %c0_i32, %c0_i32_0 : i32, i32
  }
  func.func @transform_3(%arg0: i32) -> (i32, i32) {
    %c0_i32 = arith.constant 0 : i32
    %c0_i32_0 = arith.constant 0 : i32
    %c0_i32_1 = arith.constant 0 : i32
    return %c0_i32, %c0_i32_0 : i32, i32
  }
  func.func @transform_4(%arg0: i32) -> (i32, i32) {
    %c0_i32 = arith.constant 0 : i32
    %c0_i32_0 = arith.constant 0 : i32
    %c0_i32_1 = arith.constant 0 : i32
    return %c0_i32, %c0_i32_0 : i32, i32
  }
  func.func @transform_5(%arg0: i32) -> (i32, i32, i32) {
    %c0_i32 = arith.constant 0 : i32
    %c0_i32_0 = arith.constant 0 : i32
    %c0_i32_1 = arith.constant 0 : i32
    return %arg0, %c0_i32, %c0_i32_0 : i32, i32, i32
  }
}

</mosaic_0001>

<llo_original>
// kernel: tpu_custom_call.1
$region0: #{tpu_custom_call.1}
  #allocation0 [shape = 'u32[]', space=smem, size = 0x4, offset = 0x4, fixed_abs, tag = 'smem constant byte address 0x4 - core index']
  #allocation1 [shape = 'u32[144,128]{1,0:T(1,128)}', space=vmem, size = 0x12000, scoped, tag = 'internal scratch']
  #allocation2 [shape = 'f32[1,1]{1,0:T(1,128)S(6)}', space=smem, size = 0x200, scoped, tag = 'scoped memory for tpu_custom_call.1']
  %s0 = inlined_call_operand.vmem [shape: bf16[256,64], index: 0, kind: input, shape index: {}]
  %s1 = inlined_call_operand.vmem [shape: bf16[128,64], index: 1, kind: input, shape index: {}]
  %s2 = inlined_call_operand.vmem [shape: f32[2,64], index: 2, kind: input, shape index: {}]
  %s3 = inlined_call_operand.vmem [shape: f32[8,64], index: 3, kind: input, shape index: {}]
  %s4 = inlined_call_operand.<no memory space> [shape: f32[1,1], index: 4, kind: input, shape index: {}]
  %s5 = inlined_call_operand.hbm [shape: f32[1,1,256], index: 5, kind: output, shape index: {}]
  %s6 = sld [smem:[#allocation0]]
  $region30: #{tpu_custom_call.1} parent=0
    _
  %s8 = ssub.s32 1, %s6
  %s9 = scalar_select 0, %s8, %s6
  %10 = sst [smem:[#allocation2]] %s4
  $region1: #{tpu_custom_call.1} parent=0
    #allocation3 [shape = 'u8[1024]{0}', space=vmem, size = 0x400, scoped, tag = 'output window, operand 0, single buffered']
    #allocation4 [shape = 's32[1]{0}', space=sflag, size = 0x4, scoped, tag = 'scoped memory for tpu_custom_call.1']
    %11 = vsyncpa [#allocation4], 0
    // Predicated region
    $region2: #{tpu_custom_call.1} parent=1 // pred_check
      _
    $region3: #{tpu_custom_call.1} parent=1 // pred_check_branch
      %13 = sbr.rel (0) target = $region5
    $region4: #{tpu_custom_call.1} parent=1 // pred_region
      _
    $region5: #{tpu_custom_call.1} parent=1 // pred_fallthru
      _
    // Predicated region
    $region6: #{tpu_custom_call.1} parent=1 // pred_check
      _
    $region7: #{tpu_custom_call.1} parent=1 // pred_check_branch
      %15 = sbr.rel (0) target = $region9
    $region8: #{tpu_custom_call.1} parent=1 // pred_region
      _
    $region9: #{tpu_custom_call.1} parent=1 // pred_fallthru
      _
    // Predicated region
    $region10: #{tpu_custom_call.1} parent=1 // pred_check
      _
    $region11: #{tpu_custom_call.1} parent=1 // pred_check_branch
      %17 = sbr.rel (0) target = $region13
    $region12: #{tpu_custom_call.1} parent=1 // pred_region
      _
    $region13: #{tpu_custom_call.1} parent=1 // pred_fallthru
      _
    // Predicated region
    $region14: #{tpu_custom_call.1} parent=1 // pred_check
      _
    $region15: #{tpu_custom_call.1} parent=1 // pred_check_branch
      %19 = sbr.rel (0) target = $region17
    $region16: #{tpu_custom_call.1} parent=1 // pred_region
      _
    $region17: #{tpu_custom_call.1} parent=1 // pred_fallthru
      _
    // Predicated region
    $region18: #{tpu_custom_call.1} parent=1 // pred_check
      _
    $region19: #{tpu_custom_call.1} parent=1 // pred_check_branch
      %21 = sbr.rel (0) target = $region21
    $region20: #{tpu_custom_call.1} parent=1 // pred_region
      _
    $region21: #{tpu_custom_call.1} parent=1 // pred_fallthru
      _
    %v23 = vld [vmem:[%s1] sm:$0xf]
    %v24 = vld [vmem:[%s1 + $0x4] sm:$0xf]
    %v25 = vld [vmem:[%s1 + $0x8] sm:$0xf]
    %v26 = vld [vmem:[%s1 + $0xc] sm:$0xf]
    %v27 = vld [vmem:[%s1 + $0x10] sm:$0xf]
    %v28 = vld [vmem:[%s1 + $0x14] sm:$0xf]
    %v29 = vld [vmem:[%s1 + $0x18] sm:$0xf]
    %v30 = vld [vmem:[%s1 + $0x1c] sm:$0xf]
    %v31 = vld [vmem:[%s1 + $0x20] sm:$0xf]
    %v32 = vld [vmem:[%s1 + $0x24] sm:$0xf]
    %v33 = vld [vmem:[%s1 + $0x28] sm:$0xf]
    %v34 = vld [vmem:[%s1 + $0x2c] sm:$0xf]
    %v35 = vld [vmem:[%s1 + $0x30] sm:$0xf]
    %v36 = vld [vmem:[%s1 + $0x34] sm:$0xf]
    %v37 = vld [vmem:[%s1 + $0x38] sm:$0xf]
    %v38 = vld [vmem:[%s1 + $0x3c] sm:$0xf]
    %v39 = vld [vmem:[%s2] sm:$0x1]
    %v40 = vld [vmem:[%s2 + $0x1] sm:$0x1]
    %v41 = vld [vmem:[%s3] sm:$0xff]
    %s42 = sld [smem:[#allocation2]]
    %v43 = vld [vmem:[%s0] sm:$0xf]
    %v44 = vld [vmem:[%s0 + $0x4] sm:$0xf]
    %v45 = vld [vmem:[%s0 + $0x8] sm:$0xf]
    %v46 = vld [vmem:[%s0 + $0xc] sm:$0xf]
    %v47 = vld [vmem:[%s0 + $0x10] sm:$0xf]
    %v48 = vld [vmem:[%s0 + $0x14] sm:$0xf]
    %v49 = vld [vmem:[%s0 + $0x18] sm:$0xf]
    %v50 = vld [vmem:[%s0 + $0x1c] sm:$0xf]
    %v51 = vld [vmem:[%s0 + $0x20] sm:$0xf]
    %v52 = vld [vmem:[%s0 + $0x24] sm:$0xf]
    %v53 = vld [vmem:[%s0 + $0x28] sm:$0xf]
    %v54 = vld [vmem:[%s0 + $0x2c] sm:$0xf]
    %v55 = vld [vmem:[%s0 + $0x30] sm:$0xf]
    %v56 = vld [vmem:[%s0 + $0x34] sm:$0xf]
    %v57 = vld [vmem:[%s0 + $0x38] sm:$0xf]
    %v58 = vld [vmem:[%s0 + $0x3c] sm:$0xf]
    %v59 = vld [vmem:[%s0 + $0x40] sm:$0xf]
    %v60 = vld [vmem:[%s0 + $0x44] sm:$0xf]
    %v61 = vld [vmem:[%s0 + $0x48] sm:$0xf]
    %v62 = vld [vmem:[%s0 + $0x4c] sm:$0xf]
    %v63 = vld [vmem:[%s0 + $0x50] sm:$0xf]
    %v64 = vld [vmem:[%s0 + $0x54] sm:$0xf]
    %v65 = vld [vmem:[%s0 + $0x58] sm:$0xf]
    %v66 = vld [vmem:[%s0 + $0x5c] sm:$0xf]
    %v67 = vld [vmem:[%s0 + $0x60] sm:$0xf]
    %v68 = vld [vmem:[%s0 + $0x64] sm:$0xf]
    %v69 = vld [vmem:[%s0 + $0x68] sm:$0xf]
    %v70 = vld [vmem:[%s0 + $0x6c] sm:$0xf]
    %v71 = vld [vmem:[%s0 + $0x70] sm:$0xf]
    %v72 = vld [vmem:[%s0 + $0x74] sm:$0xf]
    %v73 = vld [vmem:[%s0 + $0x78] sm:$0xf]
    %v74 = vld [vmem:[%s0 + $0x7c] sm:$0xf]
    %v75 = vlaneseq
    %v76 = vshrl.u32 %v75, 7
    %v77 = vsub.s32 0, %v76
    %v78 = vrot.slane %v39, %v77
    %v111 = vunpack.c.l.b16 %v43
    %v112 = vunpack.c.l.b16 %v44
    %v113 = vunpack.c.l.b16 %v45
    %v114 = vunpack.c.l.b16 %v46
    %v115 = vunpack.c.l.b16 %v47
    %v116 = vunpack.c.l.b16 %v48
    %v117 = vunpack.c.l.b16 %v49
    %v118 = vunpack.c.l.b16 %v50
    %v119 = vunpack.c.l.b16 %v51
    %v120 = vunpack.c.l.b16 %v52
    %v121 = vunpack.c.l.b16 %v53
    %v122 = vunpack.c.l.b16 %v54
    %v123 = vunpack.c.l.b16 %v55
    %v124 = vunpack.c.l.b16 %v56
    %v125 = vunpack.c.l.b16 %v57
    %v126 = vunpack.c.l.b16 %v58
    %v127 = vunpack.c.l.b16 %v59
    %v128 = vunpack.c.l.b16 %v60
    %v129 = vunpack.c.l.b16 %v61
    %v130 = vunpack.c.l.b16 %v62
    %v131 = vunpack.c.l.b16 %v63
    %v132 = vunpack.c.l.b16 %v64
    %v133 = vunpack.c.l.b16 %v65
    %v134 = vunpack.c.l.b16 %v66
    %v135 = vunpack.c.l.b16 %v67
    %v136 = vunpack.c.l.b16 %v68
    %v137 = vunpack.c.l.b16 %v69
    %v138 = vunpack.c.l.b16 %v70
    %v139 = vunpack.c.l.b16 %v71
    %v140 = vunpack.c.l.b16 %v72
    %v141 = vunpack.c.l.b16 %v73
    %v142 = vunpack.c.l.b16 %v74
    %v143 = vpack.c.b16 %v112, %v111
    %v144 = vpack.c.b16 %v114, %v113
    %v145 = vpack.c.b16 %v116, %v115
    %v146 = vpack.c.b16 %v118, %v117
    %v147 = vpack.c.b16 %v120, %v119
    %v148 = vpack.c.b16 %v122, %v121
    %v149 = vpack.c.b16 %v124, %v123
    %v150 = vpack.c.b16 %v126, %v125
    %v151 = vpack.c.b16 %v128, %v127
    %v152 = vpack.c.b16 %v130, %v129
    %v153 = vpack.c.b16 %v132, %v131
    %v154 = vpack.c.b16 %v134, %v133
    %v155 = vpack.c.b16 %v136, %v135
    %v156 = vpack.c.b16 %v138, %v137
    %v157 = vpack.c.b16 %v140, %v139
    %v158 = vpack.c.b16 %v142, %v141
    %v167 = vunpack.c.l.b16 %v23
    %v168 = vunpack.c.l.b16 %v24
    %v169 = vunpack.c.l.b16 %v25
    %v170 = vunpack.c.l.b16 %v26
    %v171 = vunpack.c.l.b16 %v27
    %v172 = vunpack.c.l.b16 %v28
    %v173 = vunpack.c.l.b16 %v29
    %v174 = vunpack.c.l.b16 %v30
    %v175 = vpack.c.b16 %v168, %v167
    %v176 = vpack.c.b16 %v170, %v169
    %v177 = vpack.c.b16 %v172, %v171
    %v178 = vpack.c.b16 %v174, %v173
    %vm183 = vcmask 523264
    %v185 = vsel %vm183, %v143, 0
    %v188 = vsel %vm183, %v144, 0
    %v191 = vsel %vm183, %v145, 0
    %v194 = vsel %vm183, %v146, 0
    %v197 = vsel %vm183, %v147, 0
    %v200 = vsel %vm183, %v148, 0
    %v203 = vsel %vm183, %v149, 0
    %v206 = vsel %vm183, %v150, 0
    %v209 = vsel %vm183, %v151, 0
    %v212 = vsel %vm183, %v152, 0
    %v215 = vsel %vm183, %v153, 0
    %v218 = vsel %vm183, %v154, 0
    %v221 = vsel %vm183, %v155, 0
    %v224 = vsel %vm183, %v156, 0
    %v227 = vsel %vm183, %v157, 0
    %v230 = vsel %vm183, %v158, 0
    %232 = vmatprep.subr.bf16.mxu0 0
    %233 = vmatpush1.bf16.msra.mxu0 %v175
    %234 = vmatprep.subr.bf16.mxu0 0
    %235 = vmatpush1.bf16.msra.mxu0 %v176
    %236 = vmatprep.subr.bf16.mxu0 0
    %237 = vmatpush1.bf16.msra.mxu0 %v177
    %238 = vmatprep.subr.bf16.mxu0 0
    %239 = vmatpush1.bf16.msra.mxu0 %v178
    %240 = vmatprep.subr.bf16.mxu0 0
    %241 = vmatpush1.bf16.msra.mxu0 0
    %242 = vmatprep.subr.bf16.mxu0 0
    %243 = vmatpush1.bf16.msra.mxu0 0
    %244 = vmatprep.subr.bf16.mxu0 0
    %245 = vmatpush1.bf16.msra.mxu0 0
    %246 = vmatprep.subr.bf16.mxu0 0
    %247 = vmatpush1.bf16.msra.mxu0 0
    %248 = vmatprep.subr.bf16.mxu0 0
    %249 = vmatpush1.bf16.msra.mxu0 0
    %250 = vmatprep.subr.bf16.mxu0 0
    %251 = vmatpush1.bf16.msra.mxu0 0
    %252 = vmatprep.subr.bf16.mxu0 0
    %253 = vmatpush1.bf16.msra.mxu0 0
    %254 = vmatprep.subr.bf16.mxu0 0
    %255 = vmatpush1.bf16.msra.mxu0 0
    %256 = vmatprep.subr.bf16.mxu0 0
    %257 = vmatpush1.bf16.msra.mxu0 0
    %258 = vmatprep.subr.bf16.mxu0 0
    %259 = vmatpush1.bf16.msra.mxu0 0
    %260 = vmatprep.subr.bf16.mxu0 0
    %261 = vmatpush1.bf16.msra.mxu0 0
    %262 = vmatprep.subr.bf16.mxu0 0
    %263 = vmatpush1.bf16.msra.mxu0 0
    %264 = vmatprep.mubr.bf16.mxu0 0
    %265 = vmatmul.mubr.bf16.gmra.mrb[0].mxu0 %v185
    %v266 = vpop.f32.mrb[0].mxu0
    %v267 = vadd.f32 %v78, %v266
    %v268 = vpop.f32.mrb[0].mxu0
    %v269 = vpop.f32.mrb[0].mxu0
    %v270 = vadd.f32 %v78, %v269
    %v271 = vpop.f32.mrb[0].mxu0
    %272 = vmatprep.mubr.bf16.mxu0 0
    %273 = vmatmul.mubr.bf16.gmra.mrb[0].mxu0 %v188
    %v274 = vpop.f32.mrb[0].mxu0
    %v275 = vadd.f32 %v78, %v274
    %v276 = vpop.f32.mrb[0].mxu0
    %v277 = vpop.f32.mrb[0].mxu0
    %v278 = vadd.f32 %v78, %v277
    %v279 = vpop.f32.mrb[0].mxu0
    %280 = vmatprep.mubr.bf16.mxu0 0
    %281 = vmatmul.mubr.bf16.gmra.mrb[0].mxu0 %v191
    %v282 = vpop.f32.mrb[0].mxu0
    %v283 = vadd.f32 %v78, %v282
    %v284 = vpop.f32.mrb[0].mxu0
    %v285 = vpop.f32.mrb[0].mxu0
    %v286 = vadd.f32 %v78, %v285
    %v287 = vpop.f32.mrb[0].mxu0
    %288 = vmatprep.mubr.bf16.mxu0 0
    %289 = vmatmul.mubr.bf16.gmra.mrb[0].mxu0 %v194
    %v290 = vpop.f32.mrb[0].mxu0
    %v291 = vadd.f32 %v78, %v290
    %v292 = vpop.f32.mrb[0].mxu0
    %v293 = vpop.f32.mrb[0].mxu0
    %v294 = vadd.f32 %v78, %v293
    %v295 = vpop.f32.mrb[0].mxu0
    %296 = vmatprep.mubr.bf16.mxu0 0
    %297 = vmatmul.mubr.bf16.gmra.mrb[0].mxu0 %v197
    %v298 = vpop.f32.mrb[0].mxu0
    %v299 = vadd.f32 %v78, %v298
    %v300 = vpop.f32.mrb[0].mxu0
    %v301 = vpop.f32.mrb[0].mxu0
    %v302 = vadd.f32 %v78, %v301
    %v303 = vpop.f32.mrb[0].mxu0
    %304 = vmatprep.mubr.bf16.mxu0 0
    %305 = vmatmul.mubr.bf16.gmra.mrb[0].mxu0 %v200
    %v306 = vpop.f32.mrb[0].mxu0
    %v307 = vadd.f32 %v78, %v306
    %v308 = vpop.f32.mrb[0].mxu0
    %v309 = vpop.f32.mrb[0].mxu0
    %v310 = vadd.f32 %v78, %v309
    %v311 = vpop.f32.mrb[0].mxu0
    %312 = vmatprep.mubr.bf16.mxu0 0
    %313 = vmatmul.mubr.bf16.gmra.mrb[0].mxu0 %v203
    %v314 = vpop.f32.mrb[0].mxu0
    %v315 = vadd.f32 %v78, %v314
    %v316 = vpop.f32.mrb[0].mxu0
    %v317 = vpop.f32.mrb[0].mxu0
    %v318 = vadd.f32 %v78, %v317
    %v319 = vpop.f32.mrb[0].mxu0
    %320 = vmatprep.mubr.bf16.mxu0 0
    %321 = vmatmul.mubr.bf16.gmra.mrb[0].mxu0 %v206
    %v322 = vpop.f32.mrb[0].mxu0
    %v323 = vadd.f32 %v78, %v322
    %v324 = vpop.f32.mrb[0].mxu0
    %v325 = vpop.f32.mrb[0].mxu0
    %v326 = vadd.f32 %v78, %v325
    %v327 = vpop.f32.mrb[0].mxu0
    %328 = vmatprep.mubr.bf16.mxu0 0
    %329 = vmatmul.mubr.bf16.gmra.mrb[0].mxu0 %v209
    %v330 = vpop.f32.mrb[0].mxu0
    %v331 = vadd.f32 %v78, %v330
    %v332 = vpop.f32.mrb[0].mxu0
    %v333 = vpop.f32.mrb[0].mxu0
    %v334 = vadd.f32 %v78, %v333
    %v335 = vpop.f32.mrb[0].mxu0
    %336 = vmatprep.mubr.bf16.mxu0 0
    %337 = vmatmul.mubr.bf16.gmra.mrb[0].mxu0 %v212
    %v338 = vpop.f32.mrb[0].mxu0
    %v339 = vadd.f32 %v78, %v338
    %v340 = vpop.f32.mrb[0].mxu0
    %v341 = vpop.f32.mrb[0].mxu0
    %v342 = vadd.f32 %v78, %v341
    %v343 = vpop.f32.mrb[0].mxu0
    %344 = vmatprep.mubr.bf16.mxu0 0
    %345 = vmatmul.mubr.bf16.gmra.mrb[0].mxu0 %v215
    %v346 = vpop.f32.mrb[0].mxu0
    %v347 = vadd.f32 %v78, %v346
    %v348 = vpop.f32.mrb[0].mxu0
    %v349 = vpop.f32.mrb[0].mxu0
    %v350 = vadd.f32 %v78, %v349
    %v351 = vpop.f32.mrb[0].mxu0
    %352 = vmatprep.mubr.bf16.mxu0 0
    %353 = vmatmul.mubr.bf16.gmra.mrb[0].mxu0 %v218
    %v354 = vpop.f32.mrb[0].mxu0
    %v355 = vadd.f32 %v78, %v354
    %v356 = vpop.f32.mrb[0].mxu0
    %v357 = vpop.f32.mrb[0].mxu0
    %v358 = vadd.f32 %v78, %v357
    %v359 = vpop.f32.mrb[0].mxu0
    %360 = vmatprep.mubr.bf16.mxu0 0
    %361 = vmatmul.mubr.bf16.gmra.mrb[0].mxu0 %v221
    %v362 = vpop.f32.mrb[0].mxu0
    %v363 = vadd.f32 %v78, %v362
    %v364 = vpop.f32.mrb[0].mxu0
    %v365 = vpop.f32.mrb[0].mxu0
    %v366 = vadd.f32 %v78, %v365
    %v367 = vpop.f32.mrb[0].mxu0
    %368 = vmatprep.mubr.bf16.mxu0 0
    %369 = vmatmul.mubr.bf16.gmra.mrb[0].mxu0 %v224
    %v370 = vpop.f32.mrb[0].mxu0
    %v371 = vadd.f32 %v78, %v370
    %v372 = vpop.f32.mrb[0].mxu0
    %v373 = vpop.f32.mrb[0].mxu0
    %v374 = vadd.f32 %v78, %v373
    %v375 = vpop.f32.mrb[0].mxu0
    %376 = vmatprep.mubr.bf16.mxu0 0
    %377 = vmatmul.mubr.bf16.gmra.mrb[0].mxu0 %v227
    %v378 = vpop.f32.mrb[0].mxu0
    %v379 = vadd.f32 %v78, %v378
    %v380 = vpop.f32.mrb[0].mxu0
    %v381 = vpop.f32.mrb[0].mxu0
    %v382 = vadd.f32 %v78, %v381
    %v383 = vpop.f32.mrb[0].mxu0
    %384 = vmatprep.mubr.bf16.mxu0 0
    %385 = vmatmul.mubr.bf16.gmra.mrb[0].mxu0 %v230
    %v386 = vpop.f32.mrb[0].mxu0
    %v387 = vadd.f32 %v78, %v386
    %v388 = vpop.f32.mrb[0].mxu0
    %v389 = vpop.f32.mrb[0].mxu0
    %v390 = vadd.f32 %v78, %v389
    %v391 = vpop.f32.mrb[0].mxu0
    %392 = vdwg.mxu0
    %v393 = vmax.f32 %v267, 0.0
    %v394 = vmax.f32 %v270, 0.0
    %v395 = vmax.f32 %v275, 0.0
    %v396 = vmax.f32 %v278, 0.0
    %v397 = vmax.f32 %v283, 0.0
    %v398 = vmax.f32 %v286, 0.0
    %v399 = vmax.f32 %v291, 0.0
    %v400 = vmax.f32 %v294, 0.0
    %v401 = vmax.f32 %v299, 0.0
    %v402 = vmax.f32 %v302, 0.0
    %v403 = vmax.f32 %v307, 0.0
    %v404 = vmax.f32 %v310, 0.0
    %v405 = vmax.f32 %v315, 0.0
    %v406 = vmax.f32 %v318, 0.0
    %v407 = vmax.f32 %v323, 0.0
    %v408 = vmax.f32 %v326, 0.0
    %v409 = vmax.f32 %v331, 0.0
    %v410 = vmax.f32 %v334, 0.0
    %v411 = vmax.f32 %v339, 0.0
    %v412 = vmax.f32 %v342, 0.0
    %v413 = vmax.f32 %v347, 0.0
    %v414 = vmax.f32 %v350, 0.0
    %v415 = vmax.f32 %v355, 0.0
    %v416 = vmax.f32 %v358, 0.0
    %v417 = vmax.f32 %v363, 0.0
    %v418 = vmax.f32 %v366, 0.0
    %v419 = vmax.f32 %v371, 0.0
    %v420 = vmax.f32 %v374, 0.0
    %v421 = vmax.f32 %v379, 0.0
    %v422 = vmax.f32 %v382, 0.0
    %v423 = vmax.f32 %v387, 0.0
    %v424 = vmax.f32 %v390, 0.0
    %v425 = vpack.c.bf16 %v394, %v393
    %v426 = vpack.c.bf16 %v396, %v395
    %v427 = vpack.c.bf16 %v398, %v397
    %v428 = vpack.c.bf16 %v400, %v399
    %v429 = vpack.c.bf16 %v402, %v401
    %v430 = vpack.c.bf16 %v404, %v403
    %v431 = vpack.c.bf16 %v406, %v405
    %v432 = vpack.c.bf16 %v408, %v407
    %v433 = vpack.c.bf16 %v410, %v409
    %v434 = vpack.c.bf16 %v412, %v411
    %v435 = vpack.c.bf16 %v414, %v413
    %v436 = vpack.c.bf16 %v416, %v415
    %v437 = vpack.c.bf16 %v418, %v417
    %v438 = vpack.c.bf16 %v420, %v419
    %v439 = vpack.c.bf16 %v422, %v421
    %v440 = vpack.c.bf16 %v424, %v423
    %v441 = vlaneseq
    %v442 = vshrl.u32 %v441, 7
    %v443 = vsub.s32 0, %v442
    %v444 = vrot.slane %v40, %v443
    %v453 = vunpack.c.l.b16 %v31
    %v454 = vunpack.c.l.b16 %v32
    %v455 = vunpack.c.l.b16 %v33
    %v456 = vunpack.c.l.b16 %v34
    %v457 = vunpack.c.l.b16 %v35
    %v458 = vunpack.c.l.b16 %v36
    %v459 = vunpack.c.l.b16 %v37
    %v460 = vunpack.c.l.b16 %v38
    %v461 = vpack.c.b16 %v454, %v453
    %v462 = vpack.c.b16 %v456, %v455
    %v463 = vpack.c.b16 %v458, %v457
    %v464 = vpack.c.b16 %v460, %v459
    %v470 = vsel %vm183, %v425, 0
    %v473 = vsel %vm183, %v426, 0
    %v476 = vsel %vm183, %v427, 0
    %v479 = vsel %vm183, %v428, 0
    %v482 = vsel %vm183, %v429, 0
    %v485 = vsel %vm183, %v430, 0
    %v488 = vsel %vm183, %v431, 0
    %v491 = vsel %vm183, %v432, 0
    %v494 = vsel %vm183, %v433, 0
    %v497 = vsel %vm183, %v434, 0
    %v500 = vsel %vm183, %v435, 0
    %v503 = vsel %vm183, %v436, 0
    %v506 = vsel %vm183, %v437, 0
    %v509 = vsel %vm183, %v438, 0
    %v512 = vsel %vm183, %v439, 0
    %v515 = vsel %vm183, %v440, 0
    %517 = vmatprep.subr.bf16.mxu0 0
    %518 = vmatpush1.bf16.msra.mxu0 %v461
    %519 = vmatprep.subr.bf16.mxu0 0
    %520 = vmatpush1.bf16.msra.mxu0 %v462
    %521 = vmatprep.subr.bf16.mxu0 0
    %522 = vmatpush1.bf16.msra.mxu0 %v463
    %523 = vmatprep.subr.bf16.mxu0 0
    %524 = vmatpush1.bf16.msra.mxu0 %v464
    %525 = vmatprep.subr.bf16.mxu0 0
    %526 = vmatpush1.bf16.msra.mxu0 0
    %527 = vmatprep.subr.bf16.mxu0 0
    %528 = vmatpush1.bf16.msra.mxu0 0
    %529 = vmatprep.subr.bf16.mxu0 0
    %530 = vmatpush1.bf16.msra.mxu0 0
    %531 = vmatprep.subr.bf16.mxu0 0
    %532 = vmatpush1.bf16.msra.mxu0 0
    %533 = vmatprep.subr.bf16.mxu0 0
    %534 = vmatpush1.bf16.msra.mxu0 0
    %535 = vmatprep.subr.bf16.mxu0 0
    %536 = vmatpush1.bf16.msra.mxu0 0
    %537 = vmatprep.subr.bf16.mxu0 0
    %538 = vmatpush1.bf16.msra.mxu0 0
    %539 = vmatprep.subr.bf16.mxu0 0
    %540 = vmatpush1.bf16.msra.mxu0 0
    %541 = vmatprep.subr.bf16.mxu0 0
    %542 = vmatpush1.bf16.msra.mxu0 0
    %543 = vmatprep.subr.bf16.mxu0 0
    %544 = vmatpush1.bf16.msra.mxu0 0
    %545 = vmatprep.subr.bf16.mxu0 0
    %546 = vmatpush1.bf16.msra.mxu0 0
    %547 = vmatprep.subr.bf16.mxu0 0
    %548 = vmatpush1.bf16.msra.mxu0 0
    %549 = vmatprep.mubr.bf16.mxu0 0
    %550 = vmatmul.mubr.bf16.gmra.mrb[0].mxu0 %v470
    %v551 = vpop.f32.mrb[0].mxu0
    %v552 = vadd.f32 %v444, %v551
    %v553 = vpop.f32.mrb[0].mxu0
    %v554 = vpop.f32.mrb[0].mxu0
    %v555 = vadd.f32 %v444, %v554
    %v556 = vpop.f32.mrb[0].mxu0
    %557 = vmatprep.mubr.bf16.mxu0 0
    %558 = vmatmul.mubr.bf16.gmra.mrb[0].mxu0 %v473
    %v559 = vpop.f32.mrb[0].mxu0
    %v560 = vadd.f32 %v444, %v559
    %v561 = vpop.f32.mrb[0].mxu0
    %v562 = vpop.f32.mrb[0].mxu0
    %v563 = vadd.f32 %v444, %v562
    %v564 = vpop.f32.mrb[0].mxu0
    %565 = vmatprep.mubr.bf16.mxu0 0
    %566 = vmatmul.mubr.bf16.gmra.mrb[0].mxu0 %v476
    %v567 = vpop.f32.mrb[0].mxu0
    %v568 = vadd.f32 %v444, %v567
    %v569 = vpop.f32.mrb[0].mxu0
    %v570 = vpop.f32.mrb[0].mxu0
    %v571 = vadd.f32 %v444, %v570
    %v572 = vpop.f32.mrb[0].mxu0
    %573 = vmatprep.mubr.bf16.mxu0 0
    %574 = vmatmul.mubr.bf16.gmra.mrb[0].mxu0 %v479
    %v575 = vpop.f32.mrb[0].mxu0
    %v576 = vadd.f32 %v444, %v575
    %v577 = vpop.f32.mrb[0].mxu0
    %v578 = vpop.f32.mrb[0].mxu0
    %v579 = vadd.f32 %v444, %v578
    %v580 = vpop.f32.mrb[0].mxu0
    %581 = vmatprep.mubr.bf16.mxu0 0
    %582 = vmatmul.mubr.bf16.gmra.mrb[0].mxu0 %v482
    %v583 = vpop.f32.mrb[0].mxu0
    %v584 = vadd.f32 %v444, %v583
    %v585 = vpop.f32.mrb[0].mxu0
    %v586 = vpop.f32.mrb[0].mxu0
    %v587 = vadd.f32 %v444, %v586
    %v588 = vpop.f32.mrb[0].mxu0
    %589 = vmatprep.mubr.bf16.mxu0 0
    %590 = vmatmul.mubr.bf16.gmra.mrb[0].mxu0 %v485
    %v591 = vpop.f32.mrb[0].mxu0
    %v592 = vadd.f32 %v444, %v591
    %v593 = vpop.f32.mrb[0].mxu0
    %v594 = vpop.f32.mrb[0].mxu0
    %v595 = vadd.f32 %v444, %v594
    %v596 = vpop.f32.mrb[0].mxu0
    %597 = vmatprep.mubr.bf16.mxu0 0
    %598 = vmatmul.mubr.bf16.gmra.mrb[0].mxu0 %v488
    %v599 = vpop.f32.mrb[0].mxu0
    %v600 = vadd.f32 %v444, %v599
    %v601 = vpop.f32.mrb[0].mxu0
    %v602 = vpop.f32.mrb[0].mxu0
    %v603 = vadd.f32 %v444, %v602
    %v604 = vpop.f32.mrb[0].mxu0
    %605 = vmatprep.mubr.bf16.mxu0 0
    %606 = vmatmul.mubr.bf16.gmra.mrb[0].mxu0 %v491
    %v607 = vpop.f32.mrb[0].mxu0
    %v608 = vadd.f32 %v444, %v607
    %v609 = vpop.f32.mrb[0].mxu0
    %v610 = vpop.f32.mrb[0].mxu0
    %v611 = vadd.f32 %v444, %v610
    %v612 = vpop.f32.mrb[0].mxu0
    %613 = vmatprep.mubr.bf16.mxu0 0
    %614 = vmatmul.mubr.bf16.gmra.mrb[0].mxu0 %v494
    %v615 = vpop.f32.mrb[0].mxu0
    %v616 = vadd.f32 %v444, %v615
    %v617 = vpop.f32.mrb[0].mxu0
    %v618 = vpop.f32.mrb[0].mxu0
    %v619 = vadd.f32 %v444, %v618
    %v620 = vpop.f32.mrb[0].mxu0
    %621 = vmatprep.mubr.bf16.mxu0 0
    %622 = vmatmul.mubr.bf16.gmra.mrb[0].mxu0 %v497
    %v623 = vpop.f32.mrb[0].mxu0
    %v624 = vadd.f32 %v444, %v623
    %v625 = vpop.f32.mrb[0].mxu0
    %v626 = vpop.f32.mrb[0].mxu0
    %v627 = vadd.f32 %v444, %v626
    %v628 = vpop.f32.mrb[0].mxu0
    %629 = vmatprep.mubr.bf16.mxu0 0
    %630 = vmatmul.mubr.bf16.gmra.mrb[0].mxu0 %v500
    %v631 = vpop.f32.mrb[0].mxu0
    %v632 = vadd.f32 %v444, %v631
    %v633 = vpop.f32.mrb[0].mxu0
    %v634 = vpop.f32.mrb[0].mxu0
    %v635 = vadd.f32 %v444, %v634
    %v636 = vpop.f32.mrb[0].mxu0
    %637 = vmatprep.mubr.bf16.mxu0 0
    %638 = vmatmul.mubr.bf16.gmra.mrb[0].mxu0 %v503
    %v639 = vpop.f32.mrb[0].mxu0
    %v640 = vadd.f32 %v444, %v639
    %v641 = vpop.f32.mrb[0].mxu0
    %v642 = vpop.f32.mrb[0].mxu0
    %v643 = vadd.f32 %v444, %v642
    %v644 = vpop.f32.mrb[0].mxu0
    %645 = vmatprep.mubr.bf16.mxu0 0
    %646 = vmatmul.mubr.bf16.gmra.mrb[0].mxu0 %v506
    %v647 = vpop.f32.mrb[0].mxu0
    %v648 = vadd.f32 %v444, %v647
    %v649 = vpop.f32.mrb[0].mxu0
    %v650 = vpop.f32.mrb[0].mxu0
    %v651 = vadd.f32 %v444, %v650
    %v652 = vpop.f32.mrb[0].mxu0
    %653 = vmatprep.mubr.bf16.mxu0 0
    %654 = vmatmul.mubr.bf16.gmra.mrb[0].mxu0 %v509
    %v655 = vpop.f32.mrb[0].mxu0
    %v656 = vadd.f32 %v444, %v655
    %v657 = vpop.f32.mrb[0].mxu0
    %v658 = vpop.f32.mrb[0].mxu0
    %v659 = vadd.f32 %v444, %v658
    %v660 = vpop.f32.mrb[0].mxu0
    %661 = vmatprep.mubr.bf16.mxu0 0
    %662 = vmatmul.mubr.bf16.gmra.mrb[0].mxu0 %v512
    %v663 = vpop.f32.mrb[0].mxu0
    %v664 = vadd.f32 %v444, %v663
    %v665 = vpop.f32.mrb[0].mxu0
    %v666 = vpop.f32.mrb[0].mxu0
    %v667 = vadd.f32 %v444, %v666
    %v668 = vpop.f32.mrb[0].mxu0
    %669 = vmatprep.mubr.bf16.mxu0 0
    %670 = vmatmul.mubr.bf16.gmra.mrb[0].mxu0 %v515
    %v671 = vpop.f32.mrb[0].mxu0
    %v672 = vadd.f32 %v444, %v671
    %v673 = vpop.f32.mrb[0].mxu0
    %v674 = vpop.f32.mrb[0].mxu0
    %v675 = vadd.f32 %v444, %v674
    %v676 = vpop.f32.mrb[0].mxu0
    %677 = vdwg.mxu0
    %v678 = vmax.f32 %v552, 0.0
    %v679 = vmax.f32 %v555, 0.0
    %v680 = vmax.f32 %v560, 0.0
    %v681 = vmax.f32 %v563, 0.0
    %v682 = vmax.f32 %v568, 0.0
    %v683 = vmax.f32 %v571, 0.0
    %v684 = vmax.f32 %v576, 0.0
    %v685 = vmax.f32 %v579, 0.0
    %v686 = vmax.f32 %v584, 0.0
    %v687 = vmax.f32 %v587, 0.0
    %v688 = vmax.f32 %v592, 0.0
    %v689 = vmax.f32 %v595, 0.0
    %v690 = vmax.f32 %v600, 0.0
    %v691 = vmax.f32 %v603, 0.0
    %v692 = vmax.f32 %v608, 0.0
    %v693 = vmax.f32 %v611, 0.0
    %v694 = vmax.f32 %v616, 0.0
    %v695 = vmax.f32 %v619, 0.0
    %v696 = vmax.f32 %v624, 0.0
    %v697 = vmax.f32 %v627, 0.0
    %v698 = vmax.f32 %v632, 0.0
    %v699 = vmax.f32 %v635, 0.0
    %v700 = vmax.f32 %v640, 0.0
    %v701 = vmax.f32 %v643, 0.0
    %v702 = vmax.f32 %v648, 0.0
    %v703 = vmax.f32 %v651, 0.0
    %v704 = vmax.f32 %v656, 0.0
    %v705 = vmax.f32 %v659, 0.0
    %v706 = vmax.f32 %v664, 0.0
    %v707 = vmax.f32 %v667, 0.0
    %v708 = vmax.f32 %v672, 0.0
    %v709 = vmax.f32 %v675, 0.0
    %v711 = vsel %vm183, %v41, 0
    %v714 = vsel %vm183, %v678, 0
    %v717 = vsel %vm183, %v679, 0
    %v720 = vsel %vm183, %v680, 0
    %v723 = vsel %vm183, %v681, 0
    %v726 = vsel %vm183, %v682, 0
    %v729 = vsel %vm183, %v683, 0
    %v732 = vsel %vm183, %v684, 0
    %v735 = vsel %vm183, %v685, 0
    %v738 = vsel %vm183, %v686, 0
    %v741 = vsel %vm183, %v687, 0
    %v744 = vsel %vm183, %v688, 0
    %v747 = vsel %vm183, %v689, 0
    %v750 = vsel %vm183, %v690, 0
    %v753 = vsel %vm183, %v691, 0
    %v756 = vsel %vm183, %v692, 0
    %v759 = vsel %vm183, %v693, 0
    %v762 = vsel %vm183, %v694, 0
    %v765 = vsel %vm183, %v695, 0
    %v768 = vsel %vm183, %v696, 0
    %v771 = vsel %vm183, %v697, 0
    %v774 = vsel %vm183, %v698, 0
    %v777 = vsel %vm183, %v699, 0
    %v780 = vsel %vm183, %v700, 0
    %v783 = vsel %vm183, %v701, 0
    %v786 = vsel %vm183, %v702, 0
    %v789 = vsel %vm183, %v703, 0
    %v792 = vsel %vm183, %v704, 0
    %v795 = vsel %vm183, %v705, 0
    %v798 = vsel %vm183, %v706, 0
    %v801 = vsel %vm183, %v707, 0
    %v804 = vsel %vm183, %v708, 0
    %v807 = vsel %vm183, %v709, 0
    %809 = vmatprep.subr.mxu0 0.0
    %810 = vmatpush1.xpose.msra.mxu0 %v714
    %811 = vmatprep.subr.mxu0 0.0
    %812 = vmatpush1.xpose.msra.mxu0 %v717
    %813 = vmatprep.subr.mxu0 0.0
    %814 = vmatpush1.xpose.msra.mxu0 %v720
    %815 = vmatprep.subr.mxu0 0.0
    %816 = vmatpush1.xpose.msra.mxu0 %v723
    %817 = vmatprep.subr.mxu0 0.0
    %818 = vmatpush1.xpose.msra.mxu0 %v726
    %819 = vmatprep.subr.mxu0 0.0
    %820 = vmatpush1.xpose.msra.mxu0 %v729
    %821 = vmatprep.subr.mxu0 0.0
    %822 = vmatpush1.xpose.msra.mxu0 %v732
    %823 = vmatprep.subr.mxu0 0.0
    %824 = vmatpush1.xpose.msra.mxu0 %v735
    %825 = vmatprep.subr.mxu0 0.0
    %826 = vmatpush1.xpose.msra.mxu0 %v738
    %827 = vmatprep.subr.mxu0 0.0
    %828 = vmatpush1.xpose.msra.mxu0 %v741
    %829 = vmatprep.subr.mxu0 0.0
    %830 = vmatpush1.xpose.msra.mxu0 %v744
    %831 = vmatprep.subr.mxu0 0.0
    %832 = vmatpush1.xpose.msra.mxu0 %v747
    %833 = vmatprep.subr.mxu0 0.0
    %834 = vmatpush1.xpose.msra.mxu0 %v750
    %835 = vmatprep.subr.mxu0 0.0
    %836 = vmatpush1.xpose.msra.mxu0 %v753
    %837 = vmatprep.subr.mxu0 0.0
    %838 = vmatpush1.xpose.msra.mxu0 %v756
    %839 = vmatprep.subr.mxu0 0.0
    %840 = vmatpush1.xpose.msra.mxu0 %v759
    %841 = vmatprep.subr.mxu0 0.0
    %842 = vmatpush1.xpose.msra.mxu0 %v762
    %843 = vmatprep.subr.mxu0 0.0
    %844 = vmatpush1.xpose.msra.mxu0 %v765
    %845 = vmatprep.subr.mxu0 0.0
    %846 = vmatpush1.xpose.msra.mxu0 %v768
    %847 = vmatprep.subr.mxu0 0.0
    %848 = vmatpush1.xpose.msra.mxu0 %v771
    %849 = vmatprep.subr.mxu0 0.0
    %850 = vmatpush1.xpose.msra.mxu0 %v774
    %851 = vmatprep.subr.mxu0 0.0
    %852 = vmatpush1.xpose.msra.mxu0 %v777
    %853 = vmatprep.subr.mxu0 0.0
    %854 = vmatpush1.xpose.msra.mxu0 %v780
    %855 = vmatprep.subr.mxu0 0.0
    %856 = vmatpush1.xpose.msra.mxu0 %v783
    %857 = vmatprep.subr.mxu0 0.0
    %858 = vmatpush1.xpose.msra.mxu0 %v786
    %859 = vmatprep.subr.mxu0 0.0
    %860 = vmatpush1.xpose.msra.mxu0 %v789
    %861 = vmatprep.subr.mxu0 0.0
    %862 = vmatpush1.xpose.msra.mxu0 %v792
    %863 = vmatprep.subr.mxu0 0.0
    %864 = vmatpush1.xpose.msra.mxu0 %v795
    %865 = vmatprep.subr.mxu0 0.0
    %866 = vmatpush1.xpose.msra.mxu0 %v798
    %867 = vmatprep.subr.mxu0 0.0
    %868 = vmatpush1.xpose.msra.mxu0 %v801
    %869 = vmatprep.subr.mxu0 0.0
    %870 = vmatpush1.xpose.msra.mxu0 %v804
    %871 = vmatprep.subr.mxu0 0.0
    %872 = vmatpush1.xpose.msra.mxu0 %v807
    %873 = vmatprep.mubr.f32.mxu0 0.0
    %874 = vmatmul.mubr.f32.gmra.mrb[0].mxu0 %v711
    %v875 = vpop.f32.mrb[0].mxu0
    %v876 = vadd.f32 0.0, %v875
    %v877 = vpop.f32.mrb[0].mxu0
    %v878 = vadd.f32 0.0, %v877
    %879 = vdwg.mxu0
    %v880 = vstv %s42
    %v881 = vadd.f32 %v876, %v880
    %v882 = vadd.f32 %v878, %v880
    %v885 = vcombine.low %v881, %v882
    %v887 = vunpack.c.l.s4 1966171168
    %v888 = vunpack.c.0.s8 %v887
    %v889 = vlaneseq
    %v890 = vshrl.u32 %v889, 7
    %v891 = vsub.s32 %v888, %v890
    %v892 = vrot.slane %v885, %v891
    %v894 = vunpack.c.l.s4 1966171168
    %v895 = vunpack.c.0.s8 %v894
    %v896 = vlaneseq
    %v897 = vshrl.u32 %v896, 7
    %v898 = vsub.s32 %v895, %v897
    %v899 = vrot.slane %v892, %v898
    %v901 = vlaneseq
    %vm902 = vcmp.ge.s32.totalorder %v901, 0
    %vm903 = vcmp.lt.s32.totalorder %v901, 256
    %vm904 = vmand %vm902, %vm903
    %905 = vst.msk [vmem:[#allocation3] sm:$0x3] %vm904, %v899
    // Predicated region
    $region22: #{tpu_custom_call.1} parent=1 // pred_check
      _
    $region23: #{tpu_custom_call.1} parent=1 // pred_check_branch
      %907 = sbr.rel (0) target = $region25
    $region24: #{tpu_custom_call.1} parent=1 // pred_region
      %s909 = ssub.s32 32, 32
      %910 = vsyncadd [#allocation4], %s909
      %s912 = sshll.u32 [#allocation3], 4
      %s913 = int_to_ptr.vmem [resolvable:$true] %s912
      %915 = dma.vmem_to_hbm [thread:$0]  %s913, 32, %s5, [#allocation4]
    $region25: #{tpu_custom_call.1} parent=1 // pred_fallthru
      _
    // Predicated region
    $region26: #{tpu_custom_call.1} parent=1 // pred_check
      _
    $region27: #{tpu_custom_call.1} parent=1 // pred_check_branch
      %917 = sbr.rel (0) target = $region29
    $region28: #{tpu_custom_call.1} parent=1 // pred_region
      %918 = dma.done [#allocation4], 32
    $region29: #{tpu_custom_call.1} parent=1 // pred_fallthru
      _
    %919 = vsyncpa [#allocation4], 1

</llo_original>
